<compile_context>
chip_gen: v7x
topology: tpu7x:2x2x1
jax: 0.10.0
libtpu: 0.0.40
codegen_flags: <defaults>
</compile_context>

<pallas_src>
import jax
import jax.numpy as jnp
from jax.experimental import pallas as pl
from jax.experimental.pallas import tpu as pltpu

LANES = 128
SUBLANES = 8


def _round_up(n, m):
    return ((n + m - 1) // m) * m


def _make_action_net_kernel(num_classes, c_pad):
    def kernel(x_ref, w_ref, b_ref, o_ref):
        # Linear: logits = x @ W + b  (MXU matmul, f32 accumulation).  The
        # class dim is lane-padded to c_pad; padded lanes carry bias -1e30 so
        # they vanish from the max / log-sum-exp below.
        logits = jnp.dot(x_ref[...], w_ref[...],
                         preferred_element_type=jnp.float32)
        logits = logits + b_ref[...]          # (1, c_pad) broadcasts over rows

        # Numerically stable log_softmax over the class axis.
        m = jnp.max(logits, axis=-1, keepdims=True)
        shifted = logits - m
        lse = jnp.log(jnp.sum(jnp.exp(shifted), axis=-1, keepdims=True))
        result = shifted - lse                 # (tb, c_pad) f32

        # Drop the pad lanes before the store: only the real C class columns
        # are written back to HBM (minimal output bytes, no wrapper slice).
        if c_pad != num_classes:
            result = result[:, :num_classes]
        o_ref[...] = result.astype(o_ref.dtype)

    return kernel


def action_net_forward(x, w, b, *, block_b=4096, out_dtype=jnp.float32):
    """actionNet forward: log_softmax(x @ W + b, axis=-1).

    x: (B, H) float32
    w: (H, C) float32  (transposed from torch's (C, H) nn.Linear weight)
    b: (C,)  float32
    out_dtype: jnp.float32 by default (matches the torch module); pass
      jnp.bfloat16 to halve output HBM bytes if downstream numerics allow.
    """
    B, H = x.shape
    C = w.shape[1]

    # --- class padding for the MXU matmul (N dim -> multiple of 128) --------
    c_pad = _round_up(C, LANES)
    if c_pad != C:
        # Zero weight columns + very negative bias on pad lanes: padded logits
        # contribute exp(-inf)=0 to the log-sum-exp; they are sliced off
        # in-kernel and never stored.
        w = jnp.pad(w, ((0, 0), (0, c_pad - C)))
        b = jnp.pad(b, (0, c_pad - C), constant_values=-1e30)
    w = w.astype(jnp.float32)
    b2 = b.reshape(1, c_pad).astype(jnp.float32)

    # --- batch tile selection ------------------------------------------------
    tb = min(block_b, _round_up(B, SUBLANES))
    if B >= 2 * SUBLANES:
        # Give the batch grid >= 2 steps so the "parallel" axis can shard
        # across both v7x TensorCores (no effect on single-TC v5e / v6e).
        tb = min(tb, pl.cdiv(B, 2))
    tb = _round_up(max(tb, 1), SUBLANES)       # sublane rule, even for odd block_b

    # VMEM guard: keep double-buffered x + out tiles under ~16 MiB (tiles are
    # lane-padded to 128 in VMEM, so budget with padded widths).
    bytes_per_row = 4 * 2 * (_round_up(H, LANES) + c_pad)
    max_rows = max(SUBLANES,
                   ((16 * 1024 * 1024) // bytes_per_row) // SUBLANES * SUBLANES)
    tb = max(SUBLANES, min(tb, max_rows))

    grid = (pl.cdiv(B, tb),)   # ragged tail tile: OOB-row stores are dropped

    cost = pl.CostEstimate(
        flops=2 * B * H * c_pad,
        transcendentals=B * (c_pad + 1),
        bytes_accessed=4 * (B * H + H * c_pad + c_pad + B * C),
    )

    out = pl.pallas_call(
        _make_action_net_kernel(C, c_pad),
        out_shape=jax.ShapeDtypeStruct((B, C), out_dtype),
        grid_spec=pltpu.PrefetchScalarGridSpec(
            num_scalar_prefetch=0,
            grid=grid,
            in_specs=[
                pl.BlockSpec((tb, H), lambda i: (i, 0)),      # x: batch-tiled
                pl.BlockSpec((H, c_pad), lambda i: (0, 0)),   # W: VMEM-resident
                pl.BlockSpec((1, c_pad), lambda i: (0, 0)),   # b: VMEM-resident
            ],
            out_specs=pl.BlockSpec((tb, C), lambda i: (i, 0)),
        ),
        compiler_params=pltpu.CompilerParams(
            dimension_semantics=("parallel",),   # rows independent (v7x 2 TCs)
        ),
        cost_estimate=cost,
    )(x, w, b2)
    return out


if __name__ == "__main__":
    # Small shapes consistent with the module: batch=8, h_hidden=32, num_classes=16
    B, H, C = 8, 32, 16
    key = jax.random.PRNGKey(0)
    kx, kw, kb = jax.random.split(key, 3)

    x = jax.random.normal(kx, (B, H), dtype=jnp.float32)
    # Deterministic parameter init (mimics nn.Linear's uniform(-1/sqrt(H), 1/sqrt(H)))
    bound = 1.0 / jnp.sqrt(jnp.float32(H))
    w_torch = jax.random.uniform(kw, (C, H), minval=-bound, maxval=bound, dtype=jnp.float32)
    b_param = jax.random.uniform(kb, (C,), minval=-bound, maxval=bound, dtype=jnp.float32)
    w = w_torch.T  # (H, C) layout for the kernel

    out = action_net_forward(x, w, b_param)
    jax.block_until_ready(out)

    ref = jax.nn.log_softmax(x @ w + b_param, axis=-1)
    assert out.shape == (B, C)
    assert jnp.allclose(out, ref, atol=1e-5), "mismatch vs reference (small batch)"

    # Second check: multi-tile grid with a ragged (non-divisible) batch, no x padding.
    B2 = 200
    x2 = jax.random.normal(jax.random.PRNGKey(1), (B2, H), dtype=jnp.float32)
    out2 = action_net_forward(x2, w, b_param, block_b=64)  # grid=(4,), partial tail tile
    jax.block_until_ready(out2)
    ref2 = jax.nn.log_softmax(x2 @ w + b_param, axis=-1)
    assert out2.shape == (B2, C)
    assert jnp.allclose(out2, ref2, atol=1e-5), "mismatch vs reference (ragged batch)"

    print("KERNEL_OK")
</pallas_src>

<mosaic_0001>
module attributes {stable_mosaic.version = 11 : i64} {
  func.func @kernel(%arg0: i32, %arg1: memref<8x32xf32, #tpu.memory_space<vmem>>, %arg2: memref<32x128xf32, #tpu.memory_space<vmem>>, %arg3: memref<1x128xf32, #tpu.memory_space<vmem>>, %arg4: memref<8x16xf32, #tpu.memory_space<vmem>>) attributes {dimension_semantics = [#tpu.dimension_semantics<parallel>], iteration_bounds = array<i64: 1>, scalar_prefetch = 0 : i64, scratch_operands = 0 : i64, tpu.core_type = #tpu.core_type<tc>, window_params = [{transform_indices = @transform_0, window_bounds = array<i64: 8, 32>}, {pipeline_mode = #tpu.pipeline_mode<synchronous>, transform_indices = @transform_1, window_bounds = array<i64: 32, 128>}, {pipeline_mode = #tpu.pipeline_mode<synchronous>, transform_indices = @transform_2, window_bounds = array<i64: 1, 128>}, {transform_indices = @transform_3, window_bounds = array<i64: 8, 16>}]} {
    %c0 = arith.constant 0 : index
    %c0_0 = arith.constant 0 : index
    %0 = vector.load %arg1[%c0, %c0_0] : memref<8x32xf32, #tpu.memory_space<vmem>>, vector<8x32xf32>
    %c0_1 = arith.constant 0 : index
    %c0_2 = arith.constant 0 : index
    %1 = vector.load %arg2[%c0_1, %c0_2] : memref<32x128xf32, #tpu.memory_space<vmem>>, vector<32x128xf32>
    %cst = arith.constant dense<0.000000e+00> : vector<8x128xf32>
    %2 = tpu.matmul %0, %1, %cst {dimension_numbers = #tpu.dot_dimension_numbers<[1], [0], [0], [1], [0, 0, 1, 1], [], []>} : vector<8x32xf32>, vector<32x128xf32>, vector<8x128xf32> -> vector<8x128xf32>
    %c0_3 = arith.constant 0 : index
    %c0_4 = arith.constant 0 : index
    %3 = vector.load %arg3[%c0_3, %c0_4] : memref<1x128xf32, #tpu.memory_space<vmem>>, vector<1x128xf32>
    %4 = vector.broadcast %3 : vector<1x128xf32> to vector<8x128xf32>
    %5 = arith.addf %2, %4 : vector<8x128xf32>
    %cst_5 = arith.constant dense<0xFF800000> : vector<8xf32>
    %6 = vector.multi_reduction <maximumf>, %5, %cst_5 [1] : vector<8x128xf32> to vector<8xf32>
    %7 = vector.shape_cast %6 : vector<8xf32> to vector<8x1xf32>
    %8 = vector.broadcast %7 : vector<8x1xf32> to vector<8x128xf32>
    %9 = arith.subf %5, %8 : vector<8x128xf32>
    %10 = math.exp %9 : vector<8x128xf32>
    %cst_6 = arith.constant dense<0.000000e+00> : vector<8xf32>
    %11 = vector.multi_reduction <add>, %10, %cst_6 [1] : vector<8x128xf32> to vector<8xf32>
    %12 = vector.shape_cast %11 : vector<8xf32> to vector<8x1xf32>
    %13 = math.log %12 : vector<8x1xf32>
    %14 = vector.broadcast %13 : vector<8x1xf32> to vector<8x128xf32>
    %15 = arith.subf %9, %14 : vector<8x128xf32>
    %16 = vector.extract_strided_slice %15 {offsets = [0, 0], sizes = [8, 16], strides = [1, 1]} : vector<8x128xf32> to vector<8x16xf32>
    %c0_7 = arith.constant 0 : index
    %c0_8 = arith.constant 0 : index
    %17 = vector.load %arg4[%c0_7, %c0_8] : memref<8x16xf32, #tpu.memory_space<vmem>>, vector<8x16xf32>
    tpu.vector_store %arg4[%c0_7, %c0_8], %16 {strides = array<i32>} : memref<8x16xf32, #tpu.memory_space<vmem>>, vector<8x16xf32>,
    return
  }
  func.func @transform_0(%arg0: i32) -> (i32, i32) {
    %c0_i32 = arith.constant 0 : i32
    %c0_i32_0 = arith.constant 0 : i32
    return %arg0, %c0_i32 : i32, i32
  }
  func.func @transform_1(%arg0: i32) -> (i32, i32) {
    %c0_i32 = arith.constant 0 : i32
    %c0_i32_0 = arith.constant 0 : i32
    %c0_i32_1 = arith.constant 0 : i32
    return %c0_i32, %c0_i32_0 : i32, i32
  }
  func.func @transform_2(%arg0: i32) -> (i32, i32) {
    %c0_i32 = arith.constant 0 : i32
    %c0_i32_0 = arith.constant 0 : i32
    %c0_i32_1 = arith.constant 0 : i32
    return %c0_i32, %c0_i32_0 : i32, i32
  }
  func.func @transform_3(%arg0: i32) -> (i32, i32) {
    %c0_i32 = arith.constant 0 : i32
    %c0_i32_0 = arith.constant 0 : i32
    return %arg0, %c0_i32 : i32, i32
  }
}

</mosaic_0001>

<llo_original>
// kernel: tpu_custom_call.1
$region0: #{tpu_custom_call.1}
  #allocation0 [shape = 'u32[]', space=smem, size = 0x4, offset = 0x4, fixed_abs, tag = 'smem constant byte address 0x4 - core index']
  #allocation1 [shape = 'u32[144,128]{1,0:T(1,128)}', space=vmem, size = 0x12000, scoped, tag = 'internal scratch']
  %s0 = inlined_call_operand.hbm [shape: f32[8,32], index: 0, kind: input, shape index: {}]
  %s1 = inlined_call_operand.hbm [shape: f32[32,128], index: 1, kind: input, shape index: {}]
  %s2 = inlined_call_operand.vmem [shape: f32[1,128], index: 2, kind: input, shape index: {}]
  %s3 = inlined_call_operand.hbm [shape: f32[8,16], index: 3, kind: output, shape index: {}]
  %s4 = sld [smem:[#allocation0]]
  $region30: #{tpu_custom_call.1} parent=0
    _
  %s6 = ssub.s32 1, %s4
  %s7 = scalar_select 0, %s6, %s4
  $region1: #{tpu_custom_call.1} parent=0
    #allocation2 [shape = 'u8[4096]{0}', space=vmem, size = 0x1000, scoped, tag = 'input window, operand 0, single buffered']
    #allocation3 [shape = 's32[1]{0}', space=sflag, size = 0x4, scoped, tag = 'scoped memory for tpu_custom_call.1']
    #allocation4 [shape = 's32[1]{0}', space=sflag, size = 0x4, scoped, tag = 'scoped memory for tpu_custom_call.1']
    #allocation5 [shape = 'u8[16384]{0}', space=vmem, size = 0x4000, scoped, tag = 'input window, operand 1, single buffered']
    #allocation6 [shape = 's32[1]{0}', space=sflag, size = 0x4, scoped, tag = 'scoped memory for tpu_custom_call.1']
    #allocation7 [shape = 'u8[4096]{0}', space=vmem, size = 0x1000, scoped, tag = 'output window, operand 0, single buffered']
    %8 = vsyncpa [#allocation3], 0
    %9 = vsyncpa [#allocation6], 0
    %10 = vsyncpa [#allocation4], 0
    // Predicated region
    $region2: #{tpu_custom_call.1} parent=1 // pred_check
      _
    $region3: #{tpu_custom_call.1} parent=1 // pred_check_branch
      %12 = sbr.rel (0) target = $region5
    $region4: #{tpu_custom_call.1} parent=1 // pred_region
      %s14 = ssub.s32 128, 128
      %15 = vsyncadd [#allocation3], %s14
      %s17 = sshll.u32 [#allocation2], 4
      %s18 = int_to_ptr.vmem [resolvable:$true] %s17
      %20 = dma.hbm_to_vmem [thread:$0]  %s0, 128, %s18, [#allocation3]
    $region5: #{tpu_custom_call.1} parent=1 // pred_fallthru
      _
    // Predicated region
    $region6: #{tpu_custom_call.1} parent=1 // pred_check
      _
    $region7: #{tpu_custom_call.1} parent=1 // pred_check_branch
      %22 = sbr.rel (0) target = $region9
    $region8: #{tpu_custom_call.1} parent=1 // pred_region
      %s24 = ssub.s32 512, 512
      %25 = vsyncadd [#allocation6], %s24
      %s26 = sshll.u32 [#allocation5], 4
      %s27 = int_to_ptr.vmem [resolvable:$true] %s26
      %32 = dma.hbm_to_vmem [thread:$0]  %s1, 512, %s27, [#allocation6], 128, 128, 8
    $region9: #{tpu_custom_call.1} parent=1 // pred_fallthru
      _
    // Predicated region
    $region10: #{tpu_custom_call.1} parent=1 // pred_check
      _
    $region11: #{tpu_custom_call.1} parent=1 // pred_check_branch
      %34 = sbr.rel (0) target = $region13
    $region12: #{tpu_custom_call.1} parent=1 // pred_region
      _
    $region13: #{tpu_custom_call.1} parent=1 // pred_fallthru
      _
    // Predicated region
    $region14: #{tpu_custom_call.1} parent=1 // pred_check
      _
    $region15: #{tpu_custom_call.1} parent=1 // pred_check_branch
      %36 = sbr.rel (0) target = $region17
    $region16: #{tpu_custom_call.1} parent=1 // pred_region
      %37 = dma.done [#allocation3], 128
    $region17: #{tpu_custom_call.1} parent=1 // pred_fallthru
      _
    // Predicated region
    $region18: #{tpu_custom_call.1} parent=1 // pred_check
      _
    $region19: #{tpu_custom_call.1} parent=1 // pred_check_branch
      %39 = sbr.rel (0) target = $region21
    $region20: #{tpu_custom_call.1} parent=1 // pred_region
      %40 = dma.done [#allocation6], 512
    $region21: #{tpu_custom_call.1} parent=1 // pred_fallthru
      _
    %v41 = vld [vmem:[#allocation2] sm:$0xff]
    %v42 = vld [vmem:[#allocation5] sm:$0xff]
    %v43 = vld [vmem:[#allocation5 + $0x8] sm:$0xff]
    %v44 = vld [vmem:[#allocation5 + $0x10] sm:$0xff]
    %v45 = vld [vmem:[#allocation5 + $0x18] sm:$0xff]
    %v46 = vld [vmem:[%s2] sm:$0x1]
    %v48 = vlaneseq
    %v49 = vshrl.u32 %v48, 7
    %v50 = vsub.s32 0, %v49
    %v51 = vrot.slane %v46, %v50
    %vm53 = vcmask 261120
    %v55 = vsel %vm53, %v41, 0
    %57 = vmatprep.subr.mxu0 0.0
    %58 = vmatpush1.msra.mxu0 %v42
    %59 = vmatprep.subr.mxu0 0.0
    %60 = vmatpush1.msra.mxu0 %v43
    %61 = vmatprep.subr.mxu0 0.0
    %62 = vmatpush1.msra.mxu0 %v44
    %63 = vmatprep.subr.mxu0 0.0
    %64 = vmatpush1.msra.mxu0 %v45
    %65 = vmatprep.subr.mxu0 0.0
    %66 = vmatpush1.msra.mxu0 0.0
    %67 = vmatprep.subr.mxu0 0.0
    %68 = vmatpush1.msra.mxu0 0.0
    %69 = vmatprep.subr.mxu0 0.0
    %70 = vmatpush1.msra.mxu0 0.0
    %71 = vmatprep.subr.mxu0 0.0
    %72 = vmatpush1.msra.mxu0 0.0
    %73 = vmatprep.subr.mxu0 0.0
    %74 = vmatpush1.msra.mxu0 0.0
    %75 = vmatprep.subr.mxu0 0.0
    %76 = vmatpush1.msra.mxu0 0.0
    %77 = vmatprep.subr.mxu0 0.0
    %78 = vmatpush1.msra.mxu0 0.0
    %79 = vmatprep.subr.mxu0 0.0
    %80 = vmatpush1.msra.mxu0 0.0
    %81 = vmatprep.subr.mxu0 0.0
    %82 = vmatpush1.msra.mxu0 0.0
    %83 = vmatprep.subr.mxu0 0.0
    %84 = vmatpush1.msra.mxu0 0.0
    %85 = vmatprep.subr.mxu0 0.0
    %86 = vmatpush1.msra.mxu0 0.0
    %87 = vmatprep.subr.mxu0 0.0
    %88 = vmatpush1.msra.mxu0 0.0
    %89 = vmatprep.subr.mxu0 0.0
    %90 = vmatpush1.msra.mxu0 0.0
    %91 = vmatprep.subr.mxu0 0.0
    %92 = vmatpush1.msra.mxu0 0.0
    %93 = vmatprep.subr.mxu0 0.0
    %94 = vmatpush1.msra.mxu0 0.0
    %95 = vmatprep.subr.mxu0 0.0
    %96 = vmatpush1.msra.mxu0 0.0
    %97 = vmatprep.subr.mxu0 0.0
    %98 = vmatpush1.msra.mxu0 0.0
    %99 = vmatprep.subr.mxu0 0.0
    %100 = vmatpush1.msra.mxu0 0.0
    %101 = vmatprep.subr.mxu0 0.0
    %102 = vmatpush1.msra.mxu0 0.0
    %103 = vmatprep.subr.mxu0 0.0
    %104 = vmatpush1.msra.mxu0 0.0
    %105 = vmatprep.subr.mxu0 0.0
    %106 = vmatpush1.msra.mxu0 0.0
    %107 = vmatprep.subr.mxu0 0.0
    %108 = vmatpush1.msra.mxu0 0.0
    %109 = vmatprep.subr.mxu0 0.0
    %110 = vmatpush1.msra.mxu0 0.0
    %111 = vmatprep.subr.mxu0 0.0
    %112 = vmatpush1.msra.mxu0 0.0
    %113 = vmatprep.subr.mxu0 0.0
    %114 = vmatpush1.msra.mxu0 0.0
    %115 = vmatprep.subr.mxu0 0.0
    %116 = vmatpush1.msra.mxu0 0.0
    %117 = vmatprep.subr.mxu0 0.0
    %118 = vmatpush1.msra.mxu0 0.0
    %119 = vmatprep.subr.mxu0 0.0
    %120 = vmatpush1.msra.mxu0 0.0
    %121 = vmatprep.mubr.f32.mxu0 0.0
    %122 = vmatmul.mubr.f32.gmra.mrb[0].mxu0 %v55
    %v123 = vpop.f32.mrb[0].mxu0
    %v124 = vadd.f32 %v51, %v123
    %v125 = vpop.f32.mrb[0].mxu0
    %126 = vdwg.mxu0
    %127 = vmax.xlane.f32.xlu0 %v124
    %v128 = vpop.xlane.xlu0 %127
    %v129 = vsub.f32 %v124, %v128
    %v130 = vmul.f32 %v129, 1.442695
    %v131 = vpow.pop %v130
    %132 = vadd.xlane.f32.xlu0 %v131
    %v133 = vpop.xlane.xlu0 %132
    %v134 = vlog2.pop %v133
    %v135 = vmul.f32 %v134, 0.6931472
    %v136 = vsub.f32 %v129, %v135
    %vm137 = vcmask 130048
    %138 = vst.msk [vmem:[#allocation7] sm:$0xff] %vm137, %v136
    // Predicated region
    $region22: #{tpu_custom_call.1} parent=1 // pred_check
      _
    $region23: #{tpu_custom_call.1} parent=1 // pred_check_branch
      %140 = sbr.rel (0) target = $region25
    $region24: #{tpu_custom_call.1} parent=1 // pred_region
      %s142 = ssub.s32 128, 128
      %143 = vsyncadd [#allocation4], %s142
      %s145 = sshll.u32 [#allocation7], 4
      %s146 = int_to_ptr.vmem [resolvable:$true] %s145
      %148 = dma.vmem_to_hbm [thread:$0]  %s146, 128, %s3, [#allocation4]
    $region25: #{tpu_custom_call.1} parent=1 // pred_fallthru
      _
    // Predicated region
    $region26: #{tpu_custom_call.1} parent=1 // pred_check
      _
    $region27: #{tpu_custom_call.1} parent=1 // pred_check_branch
      %150 = sbr.rel (0) target = $region29
    $region28: #{tpu_custom_call.1} parent=1 // pred_region
      %151 = dma.done [#allocation4], 128
    $region29: #{tpu_custom_call.1} parent=1 // pred_fallthru
      _
    %152 = vsyncpa [#allocation3], 1
    %153 = vsyncpa [#allocation6], 1
    %154 = vsyncpa [#allocation4], 1

</llo_original>
